<compile_context>
chip_gen: v7x
topology: tpu7x:2x2x1
jax: 0.10.0
libtpu: 0.0.40
codegen_flags: <defaults>
</compile_context>

<pallas_src>
import functools

import jax
import jax.numpy as jnp
from jax.experimental import pallas as pl
from jax.experimental.pallas import tpu as pltpu


def _lsr_kernel(pre_ref, label_ref, out_ref, *, para_lsr, total_rows, block_rows):
    i = pl.program_id(0)

    x = pre_ref[...].astype(jnp.float32)        # (TB, C) cast in VMEM
    lbl = label_ref[...]                        # (TB, 1) int32
    tb, c = x.shape

    # Numerically-stable logsumexp over the class axis.
    m = jnp.max(x, axis=-1, keepdims=True)                              # (TB, 1)
    shifted = x - m                                                     # (TB, C)
    lse = jnp.log(jnp.sum(jnp.exp(shifted), axis=-1, keepdims=True))    # (TB, 1)

    # Fused weighted reduction.  Smoothed one-hot weights sum to 1, so
    #   loss_i = lse_i - sum_j w_ij * shifted_ij,
    #   w_ij   = para/C + (1 - para) * [j == label_i].
    smooth = para_lsr / c
    cls_ids = jax.lax.broadcasted_iota(jnp.int32, (tb, c), 1)           # (TB, C)
    w = jnp.where(cls_ids == lbl, smooth + (1.0 - para_lsr), smooth)    # (TB, C)
    weighted = jnp.sum(shifted * w, axis=-1, keepdims=True)             # (TB, 1)

    per_row = lse - weighted                                            # (TB, 1)

    # Mask padded rows of the (possibly partial) last tile.  Must stay AFTER
    # per_row is computed and before the block reduce.
    row_ids = jax.lax.broadcasted_iota(jnp.int32, (tb, 1), 0) + i * block_rows
    per_row = jnp.where(row_ids < total_rows, per_row, 0.0)

    # Per-block partial sum (no cross-step state -> grid axis is "parallel").
    out_ref[...] = jnp.sum(per_row).reshape(1, 1, 1)


def _pick_batch_tile(b, c, native_itemsize):
    """Batch tile sized against the in-kernel f32 working set:
       2 pipeline buffers of the native-dtype logits block
       + ~4 live (TB, C) f32/int32 temporaries (cast/shifted, exp, iota, weights).
    Budget ~16 MiB per step, half of the 32 MiB scoped-VMEM limit we request
    (leaves headroom on v7x's 64 MiB physical VMEM)."""
    per_elem_bytes = 2 * native_itemsize + 4 * 4
    budget_bytes = 16 * 1024 * 1024
    tb = max(8, budget_bytes // max(1, c * per_elem_bytes))
    tb = (tb // 8) * 8            # multiple of 8 sublanes ...
    return min(tb, b)             # ... or the full batch dim


def cross_entropy_loss_lsr(pre, label, para_lsr=0.2, size_average=True):
    """pre: (B, C) logits (any float dtype); label: (B,) integer class ids."""
    b, c = pre.shape
    label2d = label.astype(jnp.int32).reshape(b, 1)

    itemsize = jnp.dtype(pre.dtype).itemsize
    tb = _pick_batch_tile(b, c, itemsize)
    grid_size = (b + tb - 1) // tb

    kernel = functools.partial(
        _lsr_kernel,
        para_lsr=float(para_lsr),
        total_rows=int(b),
        block_rows=int(tb),
    )

    cost = pl.CostEstimate(
        flops=6 * b * c,
        transcendentals=b * c,
        bytes_accessed=b * c * itemsize + b * 4 + grid_size * 4,
    )

    partials = pl.pallas_call(
        kernel,
        out_shape=jax.ShapeDtypeStruct((grid_size, 1, 1), jnp.float32),
        grid=(grid_size,),
        in_specs=[
            pl.BlockSpec((tb, c), lambda i: (i, 0)),      # logits tile, native dtype
            pl.BlockSpec((tb, 1), lambda i: (i, 0)),      # label tile
        ],
        out_specs=pl.BlockSpec((1, 1, 1), lambda i: (i, 0, 0)),  # per-block partial
        compiler_params=pltpu.CompilerParams(
            dimension_semantics=("parallel",),            # no cross-step carry
            vmem_limit_bytes=32 * 1024 * 1024,
        ),
        cost_estimate=cost,
    )(pre, label2d)

    total = jnp.sum(partials)                             # tiny tree-reduce outside
    if size_average:
        total = total / jnp.float32(b)
    return total


def _reference(pre, label, para_lsr=0.2, size_average=True):
    """Pure-JAX reference mirroring the PyTorch module."""
    bsz, c = pre.shape
    prob = para_lsr / c
    one_hot = jnp.full((bsz, c), prob, dtype=jnp.float32)
    one_hot = one_hot.at[jnp.arange(bsz), label].add(1.0 - para_lsr)
    logp = jax.nn.log_softmax(pre.astype(jnp.float32), axis=-1)
    loss = jnp.sum(-one_hot * logp, axis=1)
    return jnp.mean(loss) if size_average else jnp.sum(loss)


if __name__ == "__main__":
    key = jax.random.PRNGKey(0)
    k1, k2, k3, k4, k5, k6 = jax.random.split(key, 6)

    # Small shapes consistent with (batch, classes) logits.
    B, C = 8, 16
    pre = jax.random.normal(k1, (B, C), dtype=jnp.float32)
    label = jax.random.randint(k2, (B,), 0, C, dtype=jnp.int32)

    loss = cross_entropy_loss_lsr(pre, label, para_lsr=0.2, size_average=True)
    loss = jax.block_until_ready(loss)
    ref = _reference(pre, label, para_lsr=0.2, size_average=True)
    assert jnp.allclose(loss, ref, atol=1e-5, rtol=1e-5), (loss, ref)

    # Uneven batch (multi-block grid + padded-row masking), sum reduction.
    B2, C2 = 20, 48
    pre2 = jax.random.normal(k3, (B2, C2), dtype=jnp.float32)
    label2 = jax.random.randint(k4, (B2,), 0, C2, dtype=jnp.int32)
    loss2 = cross_entropy_loss_lsr(pre2, label2, para_lsr=0.2, size_average=False)
    loss2 = jax.block_until_ready(loss2)
    ref2 = _reference(pre2, label2, para_lsr=0.2, size_average=False)
    assert jnp.allclose(loss2, ref2, atol=1e-4, rtol=1e-5), (loss2, ref2)

    # bf16 logits exercise the native-dtype DMA + in-kernel f32 cast path.
    B3, C3 = 16, 32
    pre3 = jax.random.normal(k5, (B3, C3), dtype=jnp.bfloat16)
    label3 = jax.random.randint(k6, (B3,), 0, C3, dtype=jnp.int32)
    loss3 = cross_entropy_loss_lsr(pre3, label3, para_lsr=0.2, size_average=True)
    loss3 = jax.block_until_ready(loss3)
    ref3 = _reference(pre3, label3, para_lsr=0.2, size_average=True)
    assert jnp.allclose(loss3, ref3, atol=1e-4, rtol=1e-4), (loss3, ref3)

    print("KERNEL_OK")
</pallas_src>

<mosaic_0001>
module attributes {stable_mosaic.version = 11 : i64} {
  func.func @_lsr_kernel(%arg0: i32, %arg1: memref<8x16xf32, #tpu.memory_space<vmem>>, %arg2: memref<8x1xi32, #tpu.memory_space<vmem>>, %arg3: memref<1x1x1xf32, #tpu.memory_space<vmem>>) attributes {dimension_semantics = [#tpu.dimension_semantics<parallel>], iteration_bounds = array<i64: 1>, scalar_prefetch = 0 : i64, scratch_operands = 0 : i64, tpu.core_type = #tpu.core_type<tc>, window_params = [{transform_indices = @transform_0, window_bounds = array<i64: 8, 16>}, {transform_indices = @transform_1, window_bounds = array<i64: 8, 1>}, {transform_indices = @transform_2, window_bounds = array<i64: 1, 1, 1>}]} {
    %c0 = arith.constant 0 : index
    %c0_0 = arith.constant 0 : index
    %0 = vector.load %arg1[%c0, %c0_0] : memref<8x16xf32, #tpu.memory_space<vmem>>, vector<8x16xf32>
    %c0_1 = arith.constant 0 : index
    %c0_2 = arith.constant 0 : index
    %1 = vector.load %arg2[%c0_1, %c0_2] : memref<8x1xi32, #tpu.memory_space<vmem>>, vector<8x1xi32>
    %cst = arith.constant dense<0xFF800000> : vector<8xf32>
    %2 = vector.multi_reduction <maximumf>, %0, %cst [1] : vector<8x16xf32> to vector<8xf32>
    %3 = vector.shape_cast %2 : vector<8xf32> to vector<8x1xf32>
    %4 = vector.broadcast %3 : vector<8x1xf32> to vector<8x16xf32>
    %5 = arith.subf %0, %4 : vector<8x16xf32>
    %6 = math.exp %5 : vector<8x16xf32>
    %cst_3 = arith.constant dense<0.000000e+00> : vector<8xf32>
    %7 = vector.multi_reduction <add>, %6, %cst_3 [1] : vector<8x16xf32> to vector<8xf32>
    %8 = vector.shape_cast %7 : vector<8xf32> to vector<8x1xf32>
    %9 = math.log %8 : vector<8x1xf32>
    %10 = tpu.iota {dimensions = array<i32: 1>} : vector<8x16xi32>
    %11 = vector.broadcast %1 : vector<8x1xi32> to vector<8x16xi32>
    %12 = arith.cmpi eq, %10, %11 : vector<8x16xi32>
    %cst_4 = arith.constant 8.125000e-01 : f32
    %cst_5 = arith.constant 1.250000e-02 : f32
    %13 = vector.broadcast %cst_4 : f32 to vector<8x16xf32>
    %14 = vector.broadcast %cst_5 : f32 to vector<8x16xf32>
    %15 = arith.select %12, %13, %14 : vector<8x16xi1>, vector<8x16xf32>
    %16 = arith.mulf %5, %15 : vector<8x16xf32>
    %cst_6 = arith.constant dense<0.000000e+00> : vector<8xf32>
    %17 = vector.multi_reduction <add>, %16, %cst_6 [1] : vector<8x16xf32> to vector<8xf32>
    %18 = vector.shape_cast %17 : vector<8xf32> to vector<8x1xf32>
    %19 = arith.subf %9, %18 : vector<8x1xf32>
    %20 = tpu.iota {dimensions = array<i32: 0>} : vector<8x1xi32>
    %c8_i32 = arith.constant 8 : i32
    %21 = arith.muli %arg0, %c8_i32 : i32
    %22 = vector.broadcast %21 : i32 to vector<8x1xi32>
    %23 = arith.addi %20, %22 : vector<8x1xi32>
    %c8_i32_7 = arith.constant 8 : i32
    %24 = vector.broadcast %c8_i32_7 : i32 to vector<8x1xi32>
    %25 = arith.cmpi slt, %23, %24 : vector<8x1xi32>
    %cst_8 = arith.constant 0.000000e+00 : f32
    %26 = vector.broadcast %cst_8 : f32 to vector<8x1xf32>
    %27 = arith.select %25, %19, %26 : vector<8x1xi1>, vector<8x1xf32>
    %28 = vector.shape_cast %27 : vector<8x1xf32> to vector<1x8x1xf32>
    %cst_9 = arith.constant dense<0.000000e+00> : vector<1xf32>
    %29 = vector.multi_reduction <add>, %28, %cst_9 [1, 2] : vector<1x8x1xf32> to vector<1xf32>
    %30 = vector.shape_cast %29 : vector<1xf32> to vector<1x1x1xf32>
    %31 = vector.extract %30[0, 0, 0] : f32 from vector<1x1x1xf32>
    %32 = vector.broadcast %31 : f32 to vector<1x1x1xf32>
    %c0_10 = arith.constant 0 : index
    %c0_11 = arith.constant 0 : index
    %c0_12 = arith.constant 0 : index
    %33 = vector.load %arg3[%c0_10, %c0_11, %c0_12] : memref<1x1x1xf32, #tpu.memory_space<vmem>>, vector<1x1x1xf32>
    tpu.vector_store %arg3[%c0_10, %c0_11, %c0_12], %32 {strides = array<i32>} : memref<1x1x1xf32, #tpu.memory_space<vmem>>, vector<1x1x1xf32>,
    return
  }
  func.func @transform_0(%arg0: i32) -> (i32, i32) {
    %c0_i32 = arith.constant 0 : i32
    %c0_i32_0 = arith.constant 0 : i32
    return %arg0, %c0_i32 : i32, i32
  }
  func.func @transform_1(%arg0: i32) -> (i32, i32) {
    %c0_i32 = arith.constant 0 : i32
    %c0_i32_0 = arith.constant 0 : i32
    return %arg0, %c0_i32 : i32, i32
  }
  func.func @transform_2(%arg0: i32) -> (i32, i32, i32) {
    %c0_i32 = arith.constant 0 : i32
    %c0_i32_0 = arith.constant 0 : i32
    %c0_i32_1 = arith.constant 0 : i32
    return %arg0, %c0_i32, %c0_i32_0 : i32, i32, i32
  }
}

</mosaic_0001>

<llo_original>
// kernel: tpu_custom_call.1
$region0: #{tpu_custom_call.1}
  #allocation0 [shape = 'u32[]', space=smem, size = 0x4, offset = 0x4, fixed_abs, tag = 'smem constant byte address 0x4 - core index']
  #allocation1 [shape = 'u32[144,128]{1,0:T(1,128)}', space=vmem, size = 0x12000, scoped, tag = 'internal scratch']
  %s0 = inlined_call_operand.vmem [shape: f32[8,16], index: 0, kind: input, shape index: {}]
  %s1 = inlined_call_operand.vmem [shape: s32[8,1], index: 1, kind: input, shape index: {}]
  %s2 = inlined_call_operand.hbm [shape: f32[1,1,1], index: 2, kind: output, shape index: {}]
  %s3 = sld [smem:[#allocation0]]
  $region18: #{tpu_custom_call.1} parent=0
    _
  %s5 = ssub.s32 1, %s3
  %s6 = scalar_select 0, %s5, %s3
  $region1: #{tpu_custom_call.1} parent=0
    #allocation2 [shape = 'u8[512]{0}', space=vmem, size = 0x400, scoped, tag = 'output window, operand 0, single buffered']
    #allocation3 [shape = 's32[1]{0}', space=sflag, size = 0x4, scoped, tag = 'scoped memory for tpu_custom_call.1']
    %7 = vsyncpa [#allocation3], 0
    // Predicated region
    $region2: #{tpu_custom_call.1} parent=1 // pred_check
      _
    $region3: #{tpu_custom_call.1} parent=1 // pred_check_branch
      %9 = sbr.rel (0) target = $region5
    $region4: #{tpu_custom_call.1} parent=1 // pred_region
      _
    $region5: #{tpu_custom_call.1} parent=1 // pred_fallthru
      _
    // Predicated region
    $region6: #{tpu_custom_call.1} parent=1 // pred_check
      _
    $region7: #{tpu_custom_call.1} parent=1 // pred_check_branch
      %11 = sbr.rel (0) target = $region9
    $region8: #{tpu_custom_call.1} parent=1 // pred_region
      _
    $region9: #{tpu_custom_call.1} parent=1 // pred_fallthru
      _
    %v12 = vld [vmem:[%s0] sm:$0xff]
    %v13 = vld [vmem:[%s1] sm:$0xff]
    %vm14 = vcmask 130048
    %v15 = vsel %vm14, %v12, -inf
    %16 = vmax.xlane.f32.xlu0 %v15
    %v17 = vpop.xlane.xlu0 %16
    %v18 = vsub.f32 %v12, %v17
    %v19 = vmul.f32 %v18, 1.442695
    %v20 = vpow.pop %v19
    %v21 = vsel %vm14, %v20, 0.0
    %22 = vadd.xlane.f32.xlu0 %v21
    %v23 = vpop.xlane.xlu0 %22
    %v24 = vlog2.pop %v23
    %v25 = vmul.f32 %v24, 0.6931472
    %v26 = vlaneseq
    %v27 = vand.u32 %v26, 127
    %28 = vset.pattern.permute.xlu0 0
    %29 = vperm.xlu0 %28, %v13
    %v30 = vpop.permute.xlu0 %29
    %vm31 = vcmp.eq.s32.totalorder %v27, %v30
    %v32 = vsel %vm31, 0.8125, 0.0125
    %v33 = vmul.f32 %v18, %v32
    %v34 = vsel %vm14, %v33, 0.0
    %35 = vadd.xlane.f32.xlu0 %v34
    %v36 = vpop.xlane.xlu0 %35
    %v37 = vsub.f32 %v25, %v36
    %v38 = vlaneseq
    %v39 = vshrl.u32 %v38, 7
    %s40 = smul.u32 0, 8
    %v41 = vstv %s40
    %v42 = vadd.s32 %v39, %v41
    %vm43 = vcmp.lt.s32.totalorder %v42, 8
    %v44 = vsel %vm43, %v37, 0.0
    %vm45 = vcmask 7168
    %v46 = vsel %vm45, %v44, 0.0
    %47 = vadd.xlane.f32.xlu0 %v46
    %v48 = vpop.xlane.xlu0 %47
    %v49 = vrot.slane %v48, 4
    %v50 = vadd.f32 %v48, %v49
    %v51 = vrot.slane %v50, 2
    %v52 = vadd.f32 %v50, %v51
    %v53 = vrot.slane %v52, 1
    %v54 = vadd.f32 %v52, %v53
    %s55 = vtos %v54
    %v56 = vstv %s55
    %vm57 = vcmask 0
    %58 = vst.msk [vmem:[#allocation2] sm:$0x1] %vm57, %v56
    // Predicated region
    $region10: #{tpu_custom_call.1} parent=1 // pred_check
      _
    $region11: #{tpu_custom_call.1} parent=1 // pred_check_branch
      %60 = sbr.rel (0) target = $region13
    $region12: #{tpu_custom_call.1} parent=1 // pred_region
      %s62 = ssub.s32 16, 16
      %63 = vsyncadd [#allocation3], %s62
      %s65 = sshll.u32 [#allocation2], 4
      %s66 = int_to_ptr.vmem [resolvable:$true] %s65
      %68 = dma.vmem_to_hbm [thread:$0]  %s66, 16, %s2, [#allocation3]
    $region13: #{tpu_custom_call.1} parent=1 // pred_fallthru
      _
    // Predicated region
    $region14: #{tpu_custom_call.1} parent=1 // pred_check
      _
    $region15: #{tpu_custom_call.1} parent=1 // pred_check_branch
      %70 = sbr.rel (0) target = $region17
    $region16: #{tpu_custom_call.1} parent=1 // pred_region
      %71 = dma.done [#allocation3], 16
    $region17: #{tpu_custom_call.1} parent=1 // pred_fallthru
      _
    %72 = vsyncpa [#allocation3], 1

</llo_original>
